<compile_context>
chip_gen: v7x
topology: tpu7x:2x2x1
jax: 0.10.0
libtpu: 0.0.40
codegen_flags: <defaults>
</compile_context>

<pallas_src>
import functools

import jax
import jax.numpy as jnp
from jax.experimental import pallas as pl
from jax.experimental.pallas import tpu as pltpu


# ----------------------------------------------------------------------------- kernel

def _leaky_relu_kernel(x_ref, o_ref, *, negative_slope):
    x = x_ref[...]
    slope = jnp.asarray(negative_slope, dtype=x.dtype)
    o_ref[...] = jnp.where(x > 0, x, x * slope)     # pure VPU select, no upcast


# ----------------------------------------------------------------------------- helpers

_SUBLANE_BY_ITEMSIZE = {4: 8, 2: 16, 1: 32}         # packed-sublane multiple per dtype width


def _round_up(x: int, m: int) -> int:
    return ((x + m - 1) // m) * m


def _round_down(x: int, m: int) -> int:
    return (x // m) * m


def _tpu_params():
    """(max_block_bytes, vmem_limit_bytes, want_multi_block) per TPU generation."""
    kind = ""
    try:
        kind = jax.devices()[0].device_kind.lower()
    except Exception:
        pass
    if "v7" in kind:
        # 64 MiB physical VMEM (32 MiB scoped default), 2 TCs, ~3.2 TB/s HBM.
        # 4 MiB blocks -> 16 MiB resident (in+out, double buffered): fits.
        return 4 << 20, 32 << 20, True
    if "v5" in kind and ("lite" in kind or "v5e" in kind):
        # v5e: 16 MiB scoped default; 3 MiB blocks -> 12 MiB resident, raise limit for headroom.
        return 3 << 20, 24 << 20, False
    # v6e / default: 128 MiB physical, 32 MiB scoped default.
    return 4 << 20, 48 << 20, False


def _pick_cols(n: int, sublane: int):
    """Widest lane-dense last dim (multiple of 128) dividing n that leaves
    rows >= sublane; fall back to the widest divisor (tiny inputs) or None (ragged)."""
    best_any = None
    for c in (4096, 2048, 1024, 512, 256, 128):
        if n % c == 0:
            if best_any is None:
                best_any = c
            if n // c >= sublane:
                return c
    return best_any


def _pick_tile_rows(rows: int, cols: int, itemsize: int, max_block_bytes: int,
                    sublane: int, want_multi_block: bool) -> int:
    """Sublane-aligned row tile sized from the block-byte budget.  Grid uses
    pl.cdiv, so tile_rows never needs to divide rows."""
    if rows <= sublane:
        return rows                                   # single full-extent block (legal)
    budget_rows = max(sublane,
                      _round_down(max_block_bytes // (cols * itemsize), sublane))
    tile = min(budget_rows, _round_up(rows, sublane))
    if want_multi_block:
        # Best effort: keep >= 2 grid blocks (and prefer an even count) so both
        # v7x TensorCores get work under dimension_semantics=("parallel",).
        grid = pl.cdiv(rows, tile)
        target_grid = max(2, _round_up(grid, 2))
        if grid != target_grid:
            tile = max(sublane, _round_up(pl.cdiv(rows, target_grid), sublane))
    return tile


def _leaky_relu_jnp(x, negative_slope):
    return jnp.where(x > 0, x, jnp.asarray(negative_slope, x.dtype) * x).astype(x.dtype)


def _leaky_relu_pallas_2d(x2d, negative_slope, itemsize, sublane,
                          max_block_bytes, vmem_limit, want_multi):
    """Run the kernel on a (rows, cols) slab with cols a multiple of 128 (or tiny)."""
    rows, cols = x2d.shape
    tile_rows = _pick_tile_rows(rows, cols, itemsize, max_block_bytes, sublane, want_multi)
    grid = (pl.cdiv(rows, tile_rows),)
    n = rows * cols
    kernel = functools.partial(_leaky_relu_kernel, negative_slope=negative_slope)
    return pl.pallas_call(
        kernel,
        out_shape=jax.ShapeDtypeStruct((rows, cols), x2d.dtype),
        grid_spec=pltpu.PrefetchScalarGridSpec(
            num_scalar_prefetch=0,
            grid=grid,
            in_specs=[pl.BlockSpec((tile_rows, cols), lambda i: (i, 0))],
            out_specs=pl.BlockSpec((tile_rows, cols), lambda i: (i, 0)),
        ),
        compiler_params=pltpu.CompilerParams(
            dimension_semantics=("parallel",),
            vmem_limit_bytes=vmem_limit,
        ),
        cost_estimate=pl.CostEstimate(
            flops=2 * n, transcendentals=0, bytes_accessed=2 * n * itemsize),
    )(x2d)


# ----------------------------------------------------------------------------- public API

def leaky_relu(x: jax.Array, negative_slope: float = 0.01,
               *, small_input_elems: int = 1 << 16, force_pallas: bool = False) -> jax.Array:
    """Elementwise LeakyReLU via Pallas. Accepts any shape/dtype."""
    orig_shape = x.shape
    dtype = x.dtype
    n = x.size
    if n == 0:
        return x

    # Tiny inputs: kernel-launch overhead dominates; XLA-fused select is faster.
    if n < small_input_elems and not force_pallas:
        return _leaky_relu_jnp(x, negative_slope)

    itemsize = jnp.dtype(dtype).itemsize
    sublane = _SUBLANE_BY_ITEMSIZE.get(itemsize, 8)
    max_block_bytes, vmem_limit, want_multi = _tpu_params()

    cols = _pick_cols(n, sublane)
    if cols is None:
        # Ragged element count: no pad/slice round trips. Run the (sublane*128)-aligned
        # prefix through the kernel and the tiny tail through plain jnp.
        chunk = sublane * 128
        n_body = (n // chunk) * chunk
        flat = jnp.ravel(x)
        if n_body == 0:
            return _leaky_relu_jnp(x, negative_slope)
        body_cols = _pick_cols(n_body, sublane)       # always >= 128 since chunk | n_body
        body2d = flat[:n_body].reshape(n_body // body_cols, body_cols)
        body = _leaky_relu_pallas_2d(body2d, negative_slope, itemsize, sublane,
                                     max_block_bytes, vmem_limit, want_multi).reshape(-1)
        tail = _leaky_relu_jnp(flat[n_body:], negative_slope)
        return jnp.concatenate([body, tail]).reshape(orig_shape)

    rows = n // cols
    x2d = jnp.ravel(x).reshape(rows, cols)            # contiguous reshape, no copy pass
    out2d = _leaky_relu_pallas_2d(x2d, negative_slope, itemsize, sublane,
                                  max_block_bytes, vmem_limit, want_multi)
    return out2d.reshape(orig_shape)


# ----------------------------------------------------------------------------- self-test

if __name__ == "__main__":
    key = jax.random.PRNGKey(0)

    # NCHW input consistent with the PyTorch module's forward; force the Pallas path.
    x = jax.random.normal(key, (2, 4, 16, 16), dtype=jnp.float32)
    y = leaky_relu(x, force_pallas=True)
    jax.block_until_ready(y)
    assert y.shape == x.shape and y.dtype == x.dtype
    assert jnp.allclose(y, _leaky_relu_jnp(x, 0.01), atol=1e-7, rtol=1e-7), \
        "mismatch vs reference (aligned small path)"

    # Larger input goes through the default (big-block) Pallas path.
    x_big = jax.random.normal(jax.random.PRNGKey(1), (8, 32, 64, 64), dtype=jnp.float32)
    y_big = leaky_relu(x_big)
    jax.block_until_ready(y_big)
    assert jnp.allclose(y_big, _leaky_relu_jnp(x_big, 0.01), atol=1e-7, rtol=1e-7), \
        "mismatch vs reference (large path)"

    # bf16 exercises the 16-row sublane alignment.
    x_bf = jax.random.normal(jax.random.PRNGKey(2), (4, 8, 32, 32), dtype=jnp.bfloat16)
    y_bf = leaky_relu(x_bf, force_pallas=True)
    jax.block_until_ready(y_bf)
    assert y_bf.dtype == x_bf.dtype
    assert jnp.allclose(y_bf.astype(jnp.float32),
                        _leaky_relu_jnp(x_bf, 0.01).astype(jnp.float32),
                        atol=1e-2, rtol=1e-2), "mismatch vs reference (bf16 path)"

    # Ragged element count exercises the aligned-prefix + jnp-tail path.
    x_r = jax.random.normal(jax.random.PRNGKey(3), (3, 5, 679), dtype=jnp.float32)
    y_r = leaky_relu(x_r, force_pallas=True)
    jax.block_until_ready(y_r)
    assert jnp.allclose(y_r, _leaky_relu_jnp(x_r, 0.01), atol=1e-7, rtol=1e-7), \
        "mismatch vs reference (ragged path)"

    print("KERNEL_OK")
</pallas_src>

<mosaic_0001>
module attributes {stable_mosaic.version = 11 : i64} {
  func.func @_leaky_relu_kernel(%arg0: i32, %arg1: memref<8x256xf32, #tpu.memory_space<vmem>>, %arg2: memref<8x256xf32, #tpu.memory_space<vmem>>) attributes {dimension_semantics = [#tpu.dimension_semantics<parallel>], iteration_bounds = array<i64: 1>, scalar_prefetch = 0 : i64, scratch_operands = 0 : i64, tpu.core_type = #tpu.core_type<tc>, window_params = [{transform_indices = @transform_0, window_bounds = array<i64: 8, 256>}, {transform_indices = @transform_1, window_bounds = array<i64: 8, 256>}]} {
    %c0 = arith.constant 0 : index
    %c0_0 = arith.constant 0 : index
    %0 = vector.load %arg1[%c0, %c0_0] : memref<8x256xf32, #tpu.memory_space<vmem>>, vector<8x256xf32>
    %cst = arith.constant 0.000000e+00 : f32
    %1 = vector.broadcast %cst : f32 to vector<8x256xf32>
    %2 = arith.cmpf ogt, %0, %1 : vector<8x256xf32>
    %cst_1 = arith.constant 0.00999999977 : f32
    %3 = vector.broadcast %cst_1 : f32 to vector<8x256xf32>
    %4 = arith.mulf %0, %3 : vector<8x256xf32>
    %5 = arith.select %2, %0, %4 : vector<8x256xi1>, vector<8x256xf32>
    %c0_2 = arith.constant 0 : index
    %c0_3 = arith.constant 0 : index
    %6 = vector.load %arg2[%c0_2, %c0_3] : memref<8x256xf32, #tpu.memory_space<vmem>>, vector<8x256xf32>
    tpu.vector_store %arg2[%c0_2, %c0_3], %5 {strides = array<i32>} : memref<8x256xf32, #tpu.memory_space<vmem>>, vector<8x256xf32>,
    return
  }
  func.func @transform_0(%arg0: i32) -> (i32, i32) {
    %c0_i32 = arith.constant 0 : i32
    %c0_i32_0 = arith.constant 0 : i32
    return %arg0, %c0_i32 : i32, i32
  }
  func.func @transform_1(%arg0: i32) -> (i32, i32) {
    %c0_i32 = arith.constant 0 : i32
    %c0_i32_0 = arith.constant 0 : i32
    return %arg0, %c0_i32 : i32, i32
  }
}

</mosaic_0001>

<llo_original>
// kernel: tpu_custom_call.1
$region0: #{tpu_custom_call.1}
  #allocation0 [shape = 'u32[]', space=smem, size = 0x4, offset = 0x4, fixed_abs, tag = 'smem constant byte address 0x4 - core index']
  #allocation1 [shape = 'u32[144,128]{1,0:T(1,128)}', space=vmem, size = 0x12000, scoped, tag = 'internal scratch']
  %s0 = inlined_call_operand.hbm [shape: f32[8,256], index: 0, kind: input, shape index: {}]
  %s1 = inlined_call_operand.hbm [shape: f32[8,256], index: 1, kind: output, shape index: {}]
  %s2 = sld [smem:[#allocation0]]
  $region18: #{tpu_custom_call.1} parent=0
    _
  %s4 = ssub.s32 1, %s2
  %s5 = scalar_select 0, %s4, %s2
  $region1: #{tpu_custom_call.1} parent=0
    #allocation2 [shape = 'u8[8192]{0}', space=vmem, size = 0x2000, scoped, tag = 'input window, operand 0, single buffered']
    #allocation3 [shape = 's32[1]{0}', space=sflag, size = 0x4, scoped, tag = 'scoped memory for tpu_custom_call.1']
    #allocation4 [shape = 's32[1]{0}', space=sflag, size = 0x4, scoped, tag = 'scoped memory for tpu_custom_call.1']
    #allocation5 [shape = 'u8[8192]{0}', space=vmem, size = 0x2000, scoped, tag = 'output window, operand 0, single buffered']
    %6 = vsyncpa [#allocation3], 0
    %7 = vsyncpa [#allocation4], 0
    // Predicated region
    $region2: #{tpu_custom_call.1} parent=1 // pred_check
      _
    $region3: #{tpu_custom_call.1} parent=1 // pred_check_branch
      %9 = sbr.rel (0) target = $region5
    $region4: #{tpu_custom_call.1} parent=1 // pred_region
      %s11 = ssub.s32 256, 256
      %12 = vsyncadd [#allocation3], %s11
      %s14 = sshll.u32 [#allocation2], 4
      %s15 = int_to_ptr.vmem [resolvable:$true] %s14
      %17 = dma.hbm_to_vmem [thread:$0]  %s0, 256, %s15, [#allocation3]
    $region5: #{tpu_custom_call.1} parent=1 // pred_fallthru
      _
    // Predicated region
    $region6: #{tpu_custom_call.1} parent=1 // pred_check
      _
    $region7: #{tpu_custom_call.1} parent=1 // pred_check_branch
      %19 = sbr.rel (0) target = $region9
    $region8: #{tpu_custom_call.1} parent=1 // pred_region
      %20 = dma.done [#allocation3], 256
    $region9: #{tpu_custom_call.1} parent=1 // pred_fallthru
      _
    %v21 = vld [vmem:[#allocation2] sm:$0xff]
    %v22 = vld [vmem:[#allocation2 + $0x8] sm:$0xff]
    %vm23 = vcmp.gt.f32.partialorder %v21, 0.0
    %vm24 = vcmp.gt.f32.partialorder %v22, 0.0
    %v25 = vmul.f32 %v21, 0.01
    %v26 = vmul.f32 %v22, 0.01
    %v27 = vsel %vm23, %v21, %v25
    %v28 = vsel %vm24, %v22, %v26
    %29 = vst [vmem:[#allocation5] sm:$0xff] %v27
    %30 = vst [vmem:[#allocation5 + $0x8] sm:$0xff] %v28
    // Predicated region
    $region10: #{tpu_custom_call.1} parent=1 // pred_check
      _
    $region11: #{tpu_custom_call.1} parent=1 // pred_check_branch
      %32 = sbr.rel (0) target = $region13
    $region12: #{tpu_custom_call.1} parent=1 // pred_region
      %s34 = ssub.s32 256, 256
      %35 = vsyncadd [#allocation4], %s34
      %s37 = sshll.u32 [#allocation5], 4
      %s38 = int_to_ptr.vmem [resolvable:$true] %s37
      %40 = dma.vmem_to_hbm [thread:$0]  %s38, 256, %s1, [#allocation4]
    $region13: #{tpu_custom_call.1} parent=1 // pred_fallthru
      _
    // Predicated region
    $region14: #{tpu_custom_call.1} parent=1 // pred_check
      _
    $region15: #{tpu_custom_call.1} parent=1 // pred_check_branch
      %42 = sbr.rel (0) target = $region17
    $region16: #{tpu_custom_call.1} parent=1 // pred_region
      %43 = dma.done [#allocation4], 256
    $region17: #{tpu_custom_call.1} parent=1 // pred_fallthru
      _
    %44 = vsyncpa [#allocation3], 1
    %45 = vsyncpa [#allocation4], 1

</llo_original>
